<compile_context>
chip_gen: v7x
topology: tpu7x:2x2x1
jax: 0.10.0
libtpu: 0.0.40
codegen_flags: <defaults>
</compile_context>

<pallas_src>
import functools

import jax
import jax.numpy as jnp
from jax.experimental import pallas as pl
from jax.experimental.pallas import tpu as pltpu


def _softplus(z):
    # torch.nn.Softplus(beta=1, threshold=20): z if z > 20 else log1p(exp(z))
    return jnp.where(z > 20.0, z, jnp.log1p(jnp.exp(jnp.minimum(z, 20.0))))


def _round_up(x, m):
    return ((x + m - 1) // m) * m


def _cdiv(a, b):
    return -(-a // b)


def _block_diag(w, pack):
    """(fin, fout) -> (pack*fin, pack*fout): `pack` copies of w on the diagonal."""
    if pack == 1:
        return w
    fin, fout = w.shape
    eye = jnp.eye(pack, dtype=w.dtype)
    return (eye[:, None, :, None] * w[None, :, None, :]).reshape(pack * fin, pack * fout)


def _bf16_act_supported():
    """bf16 VPU/EUP (tanh) path exists on v6e/v7x, not on v5e and older."""
    try:
        kind = jax.devices()[0].device_kind.lower()
    except Exception:
        return False
    if "tpu" not in kind:
        return False
    for old in ("v2", "v3", "v4", "v5"):
        if old in kind:
            return False
    return True


def fcn_kernel(n_hidden_layers, act_dtype, mm_dtype, *refs):
    if n_hidden_layers > 0:
        (x_ref, w_in_ref, b_in_ref, wh_ref, bh_ref,
         w_out_ref, b_out_ref, o_ref) = refs
    else:
        x_ref, w_in_ref, b_in_ref, w_out_ref, b_out_ref, o_ref = refs
        wh_ref = bh_ref = None

    def dense(h, w, b):
        # MXU matmul in mm_dtype operands with f32 accumulation + f32 bias add.
        return jnp.dot(h.astype(mm_dtype), w,
                       preferred_element_type=jnp.float32) + b

    # Input layer: Linear + Tanh (tanh runs in act_dtype: bf16 on v6e/v7x).
    h = jnp.tanh(dense(x_ref[...], w_in_ref[...], b_in_ref[...]).astype(act_dtype))
    # Hidden layers: statically unrolled (n_hidden_layers is a Python int).
    for i in range(n_hidden_layers):
        h = jnp.tanh(dense(h, wh_ref[i], bh_ref[i]).astype(act_dtype))
    # Output layer: store raw pre-softplus logits (softplus hoisted to wrapper
    # to avoid lane-sparse EUP work on the (tb, do=4) tile).
    o_ref[...] = dense(h, w_out_ref[...], b_out_ref[...]).astype(o_ref.dtype)


def fcn_forward(x, params, *, tile_rows=2048, matmul_dtype=None, act_dtype=None):
    """Forward pass of the FCN for x of shape (batch, N_INPUT)."""
    w_in, b_in, wh, bh, w_out, b_out = params
    n_input, n_hidden = w_in.shape
    n_out = w_out.shape[1]
    n_hidden_layers = wh.shape[0]
    batch = x.shape[0]

    if matmul_dtype is None:
        matmul_dtype = jnp.bfloat16          # every MXU generation is bf16-native
    if act_dtype is None:
        act_dtype = jnp.bfloat16 if _bf16_act_supported() else jnp.float32
    matmul_dtype = jnp.dtype(matmul_dtype)
    act_dtype = jnp.dtype(act_dtype)

    # Lane-packing factor: batch rows sharing one 128-lane vreg row.
    pack = 128 // n_hidden if (0 < n_hidden < 128 and 128 % n_hidden == 0) else 1

    # --- Pack weights block-diagonally (in the wrapper, not the kernel) ---
    w_in_p = _block_diag(w_in, pack).astype(matmul_dtype)
    b_in_p = jnp.tile(b_in, (1, pack)).astype(jnp.float32)
    w_out_p = _block_diag(w_out, pack).astype(matmul_dtype)
    b_out_p = jnp.tile(b_out, (1, pack)).astype(jnp.float32)
    if n_hidden_layers > 0:
        wh_p = jax.vmap(lambda w: _block_diag(w, pack))(wh).astype(matmul_dtype)
        bh_p = jnp.tile(bh, (1, 1, pack)).astype(jnp.float32)

    di = pack * n_input
    dh = pack * n_hidden
    do = pack * n_out

    # --- Tile / grid sizing ---
    rows = _cdiv(batch, pack)                          # packed rows needed
    # >= 2 grid steps so the "parallel" batch axis shards across both
    # TensorCores on v7x (harmless extra step on single-TC v5e/v6e).
    num_steps = max(2, _cdiv(rows, tile_rows))
    row_align = 16 if matmul_dtype.itemsize < 4 else 8  # bf16 sublane packing
    tb = _round_up(_cdiv(rows, num_steps), row_align)
    rows_p = tb * num_steps
    b_total = rows_p * pack

    x_pad = jnp.zeros((b_total, n_input), jnp.float32).at[:batch].set(
        x.astype(jnp.float32))
    x_packed = x_pad.reshape(rows_p, di).astype(matmul_dtype)

    def resident(shape):
        # Constant index_map -> DMA'd once, stays VMEM-resident across steps.
        zeros = (0,) * len(shape)
        return pl.BlockSpec(shape, lambda i, _z=zeros: _z)

    in_specs = [pl.BlockSpec((tb, di), lambda i: (i, 0)),   # x tile (pipelined)
                resident((di, dh)),
                resident((1, dh))]
    inputs = [x_packed, w_in_p, b_in_p]
    if n_hidden_layers > 0:
        in_specs += [resident((n_hidden_layers, dh, dh)),
                     resident((n_hidden_layers, 1, dh))]
        inputs += [wh_p, bh_p]
    in_specs += [resident((dh, do)), resident((1, do))]
    inputs += [w_out_p, b_out_p]

    kernel = functools.partial(fcn_kernel, n_hidden_layers, act_dtype, matmul_dtype)

    z_packed = pl.pallas_call(
        kernel,
        out_shape=jax.ShapeDtypeStruct((rows_p, do), jnp.float32),
        grid=(num_steps,),
        in_specs=in_specs,
        out_specs=pl.BlockSpec((tb, do), lambda i: (i, 0)),
        compiler_params=pltpu.CompilerParams(
            dimension_semantics=("parallel",)),              # megacore on v7x
    )(*inputs)

    # Unpack lanes back to (batch, n_out), strip padding, then softplus on the
    # tiny result array (hoisted out of the kernel).
    z = z_packed.reshape(b_total, n_out)[:batch]
    return _softplus(z)


def init_params(key, n_input, n_output, n_hidden, n_layers):
    """Deterministic init matching FCN._init_weights:
    weight ~ U(-1/sqrt(fan_in), 1/sqrt(fan_in)), bias = 0."""
    ks = jax.random.split(key, n_layers + 1)

    def lin(k, fan_in, fan_out):
        bound = 1.0 / float(fan_in) ** 0.5
        w = jax.random.uniform(k, (fan_in, fan_out), jnp.float32, -bound, bound)
        b = jnp.zeros((1, fan_out), jnp.float32)
        return w, b

    w_in, b_in = lin(ks[0], n_input, n_hidden)
    wh_list, bh_list = [], []
    for i in range(n_layers - 1):
        w, b = lin(ks[1 + i], n_hidden, n_hidden)
        wh_list.append(w)
        bh_list.append(b)
    if wh_list:
        wh = jnp.stack(wh_list)                       # (N_LAYERS-1, H, H)
        bh = jnp.stack(bh_list)                       # (N_LAYERS-1, 1, H)
    else:                                             # N_LAYERS == 1 edge case
        wh = jnp.zeros((0, n_hidden, n_hidden), jnp.float32)
        bh = jnp.zeros((0, 1, n_hidden), jnp.float32)
    w_out, b_out = lin(ks[n_layers], n_hidden, n_output)
    return w_in, b_in, wh, bh, w_out, b_out


def fcn_reference(x, params):
    w_in, b_in, wh, bh, w_out, b_out = params
    h = jnp.tanh(x @ w_in + b_in)
    for i in range(wh.shape[0]):
        h = jnp.tanh(h @ wh[i] + bh[i])
    return _softplus(h @ w_out + b_out)


if __name__ == "__main__":
    N_INPUT, N_OUTPUT, N_HIDDEN, N_LAYERS = 2, 1, 32, 3
    BATCH = 8

    key = jax.random.PRNGKey(0)
    kx, kp, kx2 = jax.random.split(key, 3)
    x = jax.random.normal(kx, (BATCH, N_INPUT), dtype=jnp.float32)
    params = init_params(kp, N_INPUT, N_OUTPUT, N_HIDDEN, N_LAYERS)

    # Test 1: strict f32 path — exact parity with the PyTorch module semantics.
    out_f32 = jax.block_until_ready(
        fcn_forward(x, params, matmul_dtype=jnp.float32, act_dtype=jnp.float32))
    ref = fcn_reference(x, params)
    assert out_f32.shape == (BATCH, N_OUTPUT)
    assert jnp.allclose(out_f32, ref, atol=1e-5, rtol=1e-5)

    # Test 2: default mixed-precision path (bf16 MXU everywhere; bf16 tanh only
    # on v6e/v7x). Looser tolerance per bf16 rounding.
    out_fast = jax.block_until_ready(fcn_forward(x, params))
    assert out_fast.shape == (BATCH, N_OUTPUT)
    assert jnp.allclose(out_fast, ref, atol=3e-2, rtol=3e-2)

    # Test 3: batch not divisible by pack*tile -> padding + multi-step grid.
    B2 = 300
    x2 = jax.random.normal(kx2, (B2, N_INPUT), dtype=jnp.float32)
    out2 = jax.block_until_ready(
        fcn_forward(x2, params, tile_rows=16,
                    matmul_dtype=jnp.float32, act_dtype=jnp.float32))
    ref2 = fcn_reference(x2, params)
    assert out2.shape == (B2, N_OUTPUT)
    assert jnp.allclose(out2, ref2, atol=1e-5, rtol=1e-5)

    # Test 4: N_LAYERS == 1 edge case (no hidden layers, wh/bh operands omitted).
    params1 = init_params(kp, N_INPUT, N_OUTPUT, N_HIDDEN, 1)
    out3 = jax.block_until_ready(
        fcn_forward(x, params1, matmul_dtype=jnp.float32, act_dtype=jnp.float32))
    ref3 = fcn_reference(x, params1)
    assert jnp.allclose(out3, ref3, atol=1e-5, rtol=1e-5)

    print("KERNEL_OK")
</pallas_src>

<mosaic_0001>
module attributes {stable_mosaic.version = 11 : i64} {
  func.func @fcn_kernel(%arg0: i32, %arg1: memref<8x8xf32, #tpu.memory_space<vmem>>, %arg2: memref<8x128xf32, #tpu.memory_space<vmem>>, %arg3: memref<1x128xf32, #tpu.memory_space<vmem>>, %arg4: memref<2x128x128xf32, #tpu.memory_space<vmem>>, %arg5: memref<2x1x128xf32, #tpu.memory_space<vmem>>, %arg6: memref<128x4xf32, #tpu.memory_space<vmem>>, %arg7: memref<1x4xf32, #tpu.memory_space<vmem>>, %arg8: memref<8x4xf32, #tpu.memory_space<vmem>>) attributes {dimension_semantics = [#tpu.dimension_semantics<parallel>], iteration_bounds = array<i64: 2>, scalar_prefetch = 0 : i64, scratch_operands = 0 : i64, tpu.core_type = #tpu.core_type<tc>, window_params = [{transform_indices = @transform_0, window_bounds = array<i64: 8, 8>}, {pipeline_mode = #tpu.pipeline_mode<synchronous>, transform_indices = @transform_1, window_bounds = array<i64: 8, 128>}, {pipeline_mode = #tpu.pipeline_mode<synchronous>, transform_indices = @transform_2, window_bounds = array<i64: 1, 128>}, {pipeline_mode = #tpu.pipeline_mode<synchronous>, transform_indices = @transform_3, window_bounds = array<i64: 2, 128, 128>}, {pipeline_mode = #tpu.pipeline_mode<synchronous>, transform_indices = @transform_4, window_bounds = array<i64: 2, 1, 128>}, {pipeline_mode = #tpu.pipeline_mode<synchronous>, transform_indices = @transform_5, window_bounds = array<i64: 128, 4>}, {pipeline_mode = #tpu.pipeline_mode<synchronous>, transform_indices = @transform_6, window_bounds = array<i64: 1, 4>}, {transform_indices = @transform_7, window_bounds = array<i64: 8, 4>}]} {
    %c0 = arith.constant 0 : index
    %c0_0 = arith.constant 0 : index
    %0 = vector.load %arg1[%c0, %c0_0] : memref<8x8xf32, #tpu.memory_space<vmem>>, vector<8x8xf32>
    %c0_1 = arith.constant 0 : index
    %c0_2 = arith.constant 0 : index
    %1 = vector.load %arg2[%c0_1, %c0_2] : memref<8x128xf32, #tpu.memory_space<vmem>>, vector<8x128xf32>
    %c0_3 = arith.constant 0 : index
    %c0_4 = arith.constant 0 : index
    %2 = vector.load %arg3[%c0_3, %c0_4] : memref<1x128xf32, #tpu.memory_space<vmem>>, vector<1x128xf32>
    %cst = arith.constant dense<0.000000e+00> : vector<8x128xf32>
    %3 = tpu.matmul %0, %1, %cst {dimension_numbers = #tpu.dot_dimension_numbers<[1], [0], [0], [1], [0, 0, 1, 1], [], []>} : vector<8x8xf32>, vector<8x128xf32>, vector<8x128xf32> -> vector<8x128xf32>
    %4 = vector.broadcast %2 : vector<1x128xf32> to vector<8x128xf32>
    %5 = arith.addf %3, %4 : vector<8x128xf32>
    %6 = math.tanh %5 : vector<8x128xf32>
    %c0_5 = arith.constant 0 : index
    %c0_6 = arith.constant 0 : index
    %c0_7 = arith.constant 0 : index
    %7 = vector.load %arg4[%c0_5, %c0_6, %c0_7] : memref<2x128x128xf32, #tpu.memory_space<vmem>>, vector<1x128x128xf32>
    %8 = vector.shape_cast %7 : vector<1x128x128xf32> to vector<128x128xf32>
    %c0_8 = arith.constant 0 : index
    %c0_9 = arith.constant 0 : index
    %c0_10 = arith.constant 0 : index
    %9 = vector.load %arg5[%c0_8, %c0_9, %c0_10] : memref<2x1x128xf32, #tpu.memory_space<vmem>>, vector<1x1x128xf32>
    %10 = vector.shape_cast %9 : vector<1x1x128xf32> to vector<1x128xf32>
    %cst_11 = arith.constant dense<0.000000e+00> : vector<8x128xf32>
    %11 = tpu.matmul %6, %8, %cst_11 {dimension_numbers = #tpu.dot_dimension_numbers<[1], [0], [0], [1], [0, 0, 1, 1], [], []>} : vector<8x128xf32>, vector<128x128xf32>, vector<8x128xf32> -> vector<8x128xf32>
    %12 = vector.broadcast %10 : vector<1x128xf32> to vector<8x128xf32>
    %13 = arith.addf %11, %12 : vector<8x128xf32>
    %14 = math.tanh %13 : vector<8x128xf32>
    %c1 = arith.constant 1 : index
    %c0_12 = arith.constant 0 : index
    %c0_13 = arith.constant 0 : index
    %15 = vector.load %arg4[%c1, %c0_12, %c0_13] : memref<2x128x128xf32, #tpu.memory_space<vmem>>, vector<1x128x128xf32>
    %16 = vector.shape_cast %15 : vector<1x128x128xf32> to vector<128x128xf32>
    %c1_14 = arith.constant 1 : index
    %c0_15 = arith.constant 0 : index
    %c0_16 = arith.constant 0 : index
    %17 = vector.load %arg5[%c1_14, %c0_15, %c0_16] : memref<2x1x128xf32, #tpu.memory_space<vmem>>, vector<1x1x128xf32>
    %18 = vector.shape_cast %17 : vector<1x1x128xf32> to vector<1x128xf32>
    %cst_17 = arith.constant dense<0.000000e+00> : vector<8x128xf32>
    %19 = tpu.matmul %14, %16, %cst_17 {dimension_numbers = #tpu.dot_dimension_numbers<[1], [0], [0], [1], [0, 0, 1, 1], [], []>} : vector<8x128xf32>, vector<128x128xf32>, vector<8x128xf32> -> vector<8x128xf32>
    %20 = vector.broadcast %18 : vector<1x128xf32> to vector<8x128xf32>
    %21 = arith.addf %19, %20 : vector<8x128xf32>
    %22 = math.tanh %21 : vector<8x128xf32>
    %c0_18 = arith.constant 0 : index
    %c0_19 = arith.constant 0 : index
    %23 = vector.load %arg6[%c0_18, %c0_19] : memref<128x4xf32, #tpu.memory_space<vmem>>, vector<128x4xf32>
    %c0_20 = arith.constant 0 : index
    %c0_21 = arith.constant 0 : index
    %24 = vector.load %arg7[%c0_20, %c0_21] : memref<1x4xf32, #tpu.memory_space<vmem>>, vector<1x4xf32>
    %cst_22 = arith.constant dense<0.000000e+00> : vector<8x4xf32>
    %25 = tpu.matmul %22, %23, %cst_22 {dimension_numbers = #tpu.dot_dimension_numbers<[1], [0], [0], [1], [0, 0, 1, 1], [], []>} : vector<8x128xf32>, vector<128x4xf32>, vector<8x4xf32> -> vector<8x4xf32>
    %26 = vector.broadcast %24 : vector<1x4xf32> to vector<8x4xf32>
    %27 = arith.addf %25, %26 : vector<8x4xf32>
    %c0_23 = arith.constant 0 : index
    %c0_24 = arith.constant 0 : index
    %28 = vector.load %arg8[%c0_23, %c0_24] : memref<8x4xf32, #tpu.memory_space<vmem>>, vector<8x4xf32>
    tpu.vector_store %arg8[%c0_23, %c0_24], %27 {strides = array<i32>} : memref<8x4xf32, #tpu.memory_space<vmem>>, vector<8x4xf32>,
    return
  }
  func.func @transform_0(%arg0: i32) -> (i32, i32) {
    %c0_i32 = arith.constant 0 : i32
    %c0_i32_0 = arith.constant 0 : i32
    return %arg0, %c0_i32 : i32, i32
  }
  func.func @transform_1(%arg0: i32) -> (i32, i32) {
    %c0_i32 = arith.constant 0 : i32
    %c0_i32_0 = arith.constant 0 : i32
    %c0_i32_1 = arith.constant 0 : i32
    return %c0_i32, %c0_i32_0 : i32, i32
  }
  func.func @transform_2(%arg0: i32) -> (i32, i32) {
    %c0_i32 = arith.constant 0 : i32
    %c0_i32_0 = arith.constant 0 : i32
    %c0_i32_1 = arith.constant 0 : i32
    return %c0_i32, %c0_i32_0 : i32, i32
  }
  func.func @transform_3(%arg0: i32) -> (i32, i32, i32) {
    %c0_i32 = arith.constant 0 : i32
    %c0_i32_0 = arith.constant 0 : i32
    %c0_i32_1 = arith.constant 0 : i32
    %c0_i32_2 = arith.constant 0 : i32
    return %c0_i32, %c0_i32_0, %c0_i32_1 : i32, i32, i32
  }
  func.func @transform_4(%arg0: i32) -> (i32, i32, i32) {
    %c0_i32 = arith.constant 0 : i32
    %c0_i32_0 = arith.constant 0 : i32
    %c0_i32_1 = arith.constant 0 : i32
    %c0_i32_2 = arith.constant 0 : i32
    return %c0_i32, %c0_i32_0, %c0_i32_1 : i32, i32, i32
  }
  func.func @transform_5(%arg0: i32) -> (i32, i32) {
    %c0_i32 = arith.constant 0 : i32
    %c0_i32_0 = arith.constant 0 : i32
    %c0_i32_1 = arith.constant 0 : i32
    return %c0_i32, %c0_i32_0 : i32, i32
  }
  func.func @transform_6(%arg0: i32) -> (i32, i32) {
    %c0_i32 = arith.constant 0 : i32
    %c0_i32_0 = arith.constant 0 : i32
    %c0_i32_1 = arith.constant 0 : i32
    return %c0_i32, %c0_i32_0 : i32, i32
  }
  func.func @transform_7(%arg0: i32) -> (i32, i32) {
    %c0_i32 = arith.constant 0 : i32
    %c0_i32_0 = arith.constant 0 : i32
    return %arg0, %c0_i32 : i32, i32
  }
}

</mosaic_0001>

<llo_original>
// kernel: tpu_custom_call.1
$region0: #{tpu_custom_call.1}
  #allocation0 [shape = 'u32[]', space=smem, size = 0x4, offset = 0x4, fixed_abs, tag = 'smem constant byte address 0x4 - core index']
  #allocation1 [shape = 'u32[144,128]{1,0:T(1,128)}', space=vmem, size = 0x12000, scoped, tag = 'internal scratch']
  %s0 = inlined_call_operand.vmem [shape: f32[16,8], index: 0, kind: input, shape index: {}]
  %s1 = inlined_call_operand.vmem [shape: f32[8,128], index: 1, kind: input, shape index: {}]
  %s2 = inlined_call_operand.vmem [shape: f32[1,128], index: 2, kind: input, shape index: {}]
  %s3 = inlined_call_operand.hbm [shape: f32[2,128,128], index: 3, kind: input, shape index: {}]
  %s4 = inlined_call_operand.vmem [shape: f32[2,1,128], index: 4, kind: input, shape index: {}]
  %s5 = inlined_call_operand.vmem [shape: f32[128,4], index: 5, kind: input, shape index: {}]
  %s6 = inlined_call_operand.vmem [shape: f32[1,4], index: 6, kind: input, shape index: {}]
  %s7 = inlined_call_operand.vmem [shape: f32[16,4], index: 7, kind: output, shape index: {}]
  %s8 = sld [smem:[#allocation0]]
  $region65: #{tpu_custom_call.1} parent=0
    _
  %s10 = ssub.s32 1, %s8
  %s11 = scalar_select 0, %s10, %s8
  $region1: #{tpu_custom_call.1} parent=0
    #allocation2 [shape = 'u8[131072]{0}', space=vmem, size = 0x20000, scoped, tag = 'input window, operand 3, single buffered']
    #allocation3 [shape = 's32[2]{0}', space=sflag, size = 0x8, scoped, tag = 'scoped memory for tpu_custom_call.1']
    %12 = vsyncpa [#allocation3], 0
    loop: start=0, step=1, limit=4
    $region2: #{tpu_custom_call.1} parent=1 // loop_pre_header
      _
    $region3: #{tpu_custom_call.1} parent=1 // loop_header
      %s14 = sphi 0, %s18
      %p15 = scmp.ge.s32.totalorder %s14, 4
      %s24 = sphi 0, %s26
      %s27 = sphi 0, %s24
      %s28 = sphi 0, %s27
      %s44 = sphi 0, %s28
      %s48 = sphi 0, %s48
      %s50 = sphi 0, %s48
      %s51 = sphi 0, %s50
      %s65 = sphi 0, %s51
      %s69 = sphi 0, %s69
      %s71 = sphi 0, %s69
      %s72 = sphi 0, %s71
      %s86 = sphi 0, %s72
      %s90 = sphi 0, %s90
      %s92 = sphi 0, %s90
      %s93 = sphi 0, %s92
      %s107 = sphi 0, %s93
      %s111 = sphi 0, %s111
      %s113 = sphi 0, %s111
      %s114 = sphi 0, %s113
      %s128 = sphi 0, %s114
      %s132 = sphi 0, %s132
      %s134 = sphi 0, %s132
      %s135 = sphi 0, %s134
      %s149 = sphi 0, %s135
      %s153 = sphi 0, %s153
      %s155 = sphi 0, %s153
      %s156 = sphi 0, %s155
      %s170 = sphi 0, %s156
      %s176 = sphi 0, %s178
      %s179 = sphi 0, %s176
      %s180 = sphi 0, %s179
      %s196 = sphi 0, %s180
    $region4: #{tpu_custom_call.1} parent=1 // loop_header_branch
      %17 = sbr.rel (%p15) target = $region8
    $region5: #{tpu_custom_call.1} parent=1 // loop_body
      %s19 = ssub.s32 %s14, 1
      %s20 = ssub.s32 %s14, 2
      %s21 = sadd.s32 %s14, 1
      %s22 = ssub.s32 %s14, %s21
      %p23 = scmp.eq.s32.totalorder %s22, 0
      %s25 = sadd.s32 %s24, 1
      %s26 = scalar_select %p23, %s24, %s25
      %p29 = pneg %p23
      %p30 = scmp.eq.s32.totalorder %s14, 1
      %p31 = por %p29, %p30
      %p32 = scmp.ne.s32.totalorder %s24, %s27
      %p33 = scmp.eq.s32.totalorder %s14, 0
      %p34 = por %p32, %p33
      %p35 = scmp.ne.s32.totalorder %s24, %s27
      %p36 = scmp.eq.s32.totalorder %s19, 1
      %p37 = por %p35, %p36
      %p38 = scmp.ne.s32.totalorder %s27, %s28
      %p39 = scmp.eq.s32.totalorder %s19, 0
      %p40 = por %p38, %p39
      %p41 = scmp.ne.s32.totalorder %s27, %s28
      %p42 = scmp.eq.s32.totalorder %s20, 1
      %p43 = por %p41, %p42
      %p45 = scmp.ne.s32.totalorder %s28, %s44
      %p46 = scmp.eq.s32.totalorder %s20, 0
      %p47 = por %p45, %p46
      %s49 = sadd.s32 %s48, 1
      %p52 = scmp.eq.s32.totalorder %s14, 1
      %p53 = scmp.ne.s32.totalorder %s48, %s50
      %p54 = scmp.eq.s32.totalorder %s14, 0
      %p55 = por %p53, %p54
      %p56 = scmp.ne.s32.totalorder %s48, %s50
      %p57 = scmp.eq.s32.totalorder %s19, 1
      %p58 = por %p56, %p57
      %p59 = scmp.ne.s32.totalorder %s50, %s51
      %p60 = scmp.eq.s32.totalorder %s19, 0
      %p61 = por %p59, %p60
      %p62 = scmp.ne.s32.totalorder %s50, %s51
      %p63 = scmp.eq.s32.totalorder %s20, 1
      %p64 = por %p62, %p63
      %p66 = scmp.ne.s32.totalorder %s51, %s65
      %p67 = scmp.eq.s32.totalorder %s20, 0
      %p68 = por %p66, %p67
      %s70 = sadd.s32 %s69, 1
      %p73 = scmp.eq.s32.totalorder %s14, 1
      %p74 = scmp.ne.s32.totalorder %s69, %s71
      %p75 = scmp.eq.s32.totalorder %s14, 0
      %p76 = por %p74, %p75
      %p77 = scmp.ne.s32.totalorder %s69, %s71
      %p78 = scmp.eq.s32.totalorder %s19, 1
      %p79 = por %p77, %p78
      %p80 = scmp.ne.s32.totalorder %s71, %s72
      %p81 = scmp.eq.s32.totalorder %s19, 0
      %p82 = por %p80, %p81
      %p83 = scmp.ne.s32.totalorder %s71, %s72
      %p84 = scmp.eq.s32.totalorder %s20, 1
      %p85 = por %p83, %p84
      %p87 = scmp.ne.s32.totalorder %s72, %s86
      %p88 = scmp.eq.s32.totalorder %s20, 0
      %p89 = por %p87, %p88
      %s91 = sadd.s32 %s90, 1
      %p94 = scmp.eq.s32.totalorder %s14, 1
      %p95 = scmp.ne.s32.totalorder %s90, %s92
      %p96 = scmp.eq.s32.totalorder %s14, 0
      %p97 = por %p95, %p96
      %p98 = scmp.ne.s32.totalorder %s90, %s92
      %p99 = scmp.eq.s32.totalorder %s19, 1
      %p100 = por %p98, %p99
      %p101 = scmp.ne.s32.totalorder %s92, %s93
      %p102 = scmp.eq.s32.totalorder %s19, 0
      %p103 = por %p101, %p102
      %p104 = scmp.ne.s32.totalorder %s92, %s93
      %p105 = scmp.eq.s32.totalorder %s20, 1
      %p106 = por %p104, %p105
      %p108 = scmp.ne.s32.totalorder %s93, %s107
      %p109 = scmp.eq.s32.totalorder %s20, 0
      %p110 = por %p108, %p109
      %s112 = sadd.s32 %s111, 1
      %p115 = scmp.eq.s32.totalorder %s14, 1
      %p116 = scmp.ne.s32.totalorder %s111, %s113
      %p117 = scmp.eq.s32.totalorder %s14, 0
      %p118 = por %p116, %p117
      %p119 = scmp.ne.s32.totalorder %s111, %s113
      %p120 = scmp.eq.s32.totalorder %s19, 1
      %p121 = por %p119, %p120
      %p122 = scmp.ne.s32.totalorder %s113, %s114
      %p123 = scmp.eq.s32.totalorder %s19, 0
      %p124 = por %p122, %p123
      %p125 = scmp.ne.s32.totalorder %s113, %s114
      %p126 = scmp.eq.s32.totalorder %s20, 1
      %p127 = por %p125, %p126
      %p129 = scmp.ne.s32.totalorder %s114, %s128
      %p130 = scmp.eq.s32.totalorder %s20, 0
      %p131 = por %p129, %p130
      %s133 = sadd.s32 %s132, 1
      %p136 = scmp.eq.s32.totalorder %s14, 1
      %p137 = scmp.ne.s32.totalorder %s132, %s134
      %p138 = scmp.eq.s32.totalorder %s14, 0
      %p139 = por %p137, %p138
      %p140 = scmp.ne.s32.totalorder %s132, %s134
      %p141 = scmp.eq.s32.totalorder %s19, 1
      %p142 = por %p140, %p141
      %p143 = scmp.ne.s32.totalorder %s134, %s135
      %p144 = scmp.eq.s32.totalorder %s19, 0
      %p145 = por %p143, %p144
      %p146 = scmp.ne.s32.totalorder %s134, %s135
      %p147 = scmp.eq.s32.totalorder %s20, 1
      %p148 = por %p146, %p147
      %p150 = scmp.ne.s32.totalorder %s135, %s149
      %p151 = scmp.eq.s32.totalorder %s20, 0
      %p152 = por %p150, %p151
      %s154 = sadd.s32 %s153, 1
      %p157 = scmp.eq.s32.totalorder %s14, 1
      %p158 = scmp.ne.s32.totalorder %s153, %s155
      %p159 = scmp.eq.s32.totalorder %s14, 0
      %p160 = por %p158, %p159
      %p161 = scmp.ne.s32.totalorder %s153, %s155
      %p162 = scmp.eq.s32.totalorder %s19, 1
      %p163 = por %p161, %p162
      %p164 = scmp.ne.s32.totalorder %s155, %s156
      %p165 = scmp.eq.s32.totalorder %s19, 0
      %p166 = por %p164, %p165
      %p167 = scmp.ne.s32.totalorder %s155, %s156
      %p168 = scmp.eq.s32.totalorder %s20, 1
      %p169 = por %p167, %p168
      %p171 = scmp.ne.s32.totalorder %s156, %s170
      %p172 = scmp.eq.s32.totalorder %s20, 0
      %p173 = por %p171, %p172
      %s174 = ssub.s32 %s14, %s21
      %p175 = scmp.eq.s32.totalorder %s174, 0
      %s177 = sadd.s32 %s176, 1
      %s178 = scalar_select %p175, %s176, %s177
      %p181 = pneg %p175
      %p182 = scmp.eq.s32.totalorder %s14, 1
      %p183 = por %p181, %p182
      %p184 = scmp.ne.s32.totalorder %s176, %s179
      %p185 = scmp.eq.s32.totalorder %s14, 0
      %p186 = por %p184, %p185
      %p187 = scmp.ne.s32.totalorder %s176, %s179
      %p188 = scmp.eq.s32.totalorder %s19, 1
      %p189 = por %p187, %p188
      %p190 = scmp.ne.s32.totalorder %s179, %s180
      %p191 = scmp.eq.s32.totalorder %s19, 0
      %p192 = por %p190, %p191
      %p193 = scmp.ne.s32.totalorder %s179, %s180
      %p194 = scmp.eq.s32.totalorder %s20, 1
      %p195 = por %p193, %p194
      %p197 = scmp.ne.s32.totalorder %s180, %s196
      %p198 = scmp.eq.s32.totalorder %s20, 0
      %p199 = por %p197, %p198
      %p200 = scmp.le.s32.totalorder 1, %s14
      %p201 = scmp.lt.s32.totalorder %s14, 3
      %p202 = pnand %p200, %p201
      %p203 = pneg %p202
      // Predicated region
      $region9: #{tpu_custom_call.1} parent=5 // pred_check
        _
      $region10: #{tpu_custom_call.1} parent=5 // pred_check_branch
        %205 = sbr.rel (%p202) target = $region12
      $region11: #{tpu_custom_call.1} parent=5 // pred_region
        %s206 = ssub.s32 %s14, 1
        // Predicated region
        $region13: #{tpu_custom_call.1} parent=11 // pred_check
          %p207 = pneg %p61
        $region14: #{tpu_custom_call.1} parent=11 // pred_check_branch
          %209 = sbr.rel (%p207) target = $region16
        $region15: #{tpu_custom_call.1} parent=11 // pred_region
          _
        $region16: #{tpu_custom_call.1} parent=11 // pred_fallthru
          _
        // Predicated region
        $region17: #{tpu_custom_call.1} parent=11 // pred_check
          %p210 = pneg %p82
        $region18: #{tpu_custom_call.1} parent=11 // pred_check_branch
          %212 = sbr.rel (%p210) target = $region20
        $region19: #{tpu_custom_call.1} parent=11 // pred_region
          _
        $region20: #{tpu_custom_call.1} parent=11 // pred_fallthru
          _
        // Predicated region
        $region21: #{tpu_custom_call.1} parent=11 // pred_check
          %p213 = pneg %p103
        $region22: #{tpu_custom_call.1} parent=11 // pred_check_branch
          %215 = sbr.rel (%p213) target = $region24
        $region23: #{tpu_custom_call.1} parent=11 // pred_region
          %s217 = ssub.s32 4096, 4096
          %218 = vsyncadd [#allocation3], %s217
          %s219 = sshll.u32 [#allocation2], 4
          %s220 = int_to_ptr.vmem [resolvable:$true] %s219
          %225 = dma.hbm_to_vmem [thread:$0]  %s3, 4096, %s220, [#allocation3], 128, 128, 8
        $region24: #{tpu_custom_call.1} parent=11 // pred_fallthru
          _
        // Predicated region
        $region25: #{tpu_custom_call.1} parent=11 // pred_check
          %p226 = pneg %p124
        $region26: #{tpu_custom_call.1} parent=11 // pred_check_branch
          %228 = sbr.rel (%p226) target = $region28
        $region27: #{tpu_custom_call.1} parent=11 // pred_region
          _
        $region28: #{tpu_custom_call.1} parent=11 // pred_fallthru
          _
        // Predicated region
        $region29: #{tpu_custom_call.1} parent=11 // pred_check
          %p229 = pneg %p145
        $region30: #{tpu_custom_call.1} parent=11 // pred_check_branch
          %231 = sbr.rel (%p229) target = $region32
        $region31: #{tpu_custom_call.1} parent=11 // pred_region
          _
        $region32: #{tpu_custom_call.1} parent=11 // pred_fallthru
          _
        // Predicated region
        $region33: #{tpu_custom_call.1} parent=11 // pred_check
          %p232 = pneg %p166
        $region34: #{tpu_custom_call.1} parent=11 // pred_check_branch
          %234 = sbr.rel (%p232) target = $region36
        $region35: #{tpu_custom_call.1} parent=11 // pred_region
          _
        $region36: #{tpu_custom_call.1} parent=11 // pred_fallthru
          _
      $region12: #{tpu_custom_call.1} parent=5 // pred_fallthru
        _
      %p235 = scmp.lt.s32.totalorder %s14, 2
      // Predicated region
      $region37: #{tpu_custom_call.1} parent=5 // pred_check
        %p236 = pneg %p235
      $region38: #{tpu_custom_call.1} parent=5 // pred_check_branch
        %238 = sbr.rel (%p236) target = $region40
      $region39: #{tpu_custom_call.1} parent=5 // pred_region
        // Predicated region
        $region41: #{tpu_custom_call.1} parent=39 // pred_check
          %p239 = pneg %p34
        $region42: #{tpu_custom_call.1} parent=39 // pred_check_branch
          %241 = sbr.rel (%p239) target = $region44
        $region43: #{tpu_custom_call.1} parent=39 // pred_region
          %p242 = scmp.lt.s32.totalorder %s14, 1
          %s243 = scalar_select %p242, %s14, 1
          %s244 = smul.addr %s243, 8
          %s245 = scalar_lea.vmem %s0, %s244
        $region44: #{tpu_custom_call.1} parent=39 // pred_fallthru
          _
      $region40: #{tpu_custom_call.1} parent=5 // pred_fallthru
        _
      %p246 = scmp.le.s32.totalorder 1, %s14
      %p247 = scmp.lt.s32.totalorder %s14, 3
      %p248 = pnand %p246, %p247
      %p249 = pneg %p248
      // Predicated region
      $region45: #{tpu_custom_call.1} parent=5 // pred_check
        _
      $region46: #{tpu_custom_call.1} parent=5 // pred_check_branch
        %251 = sbr.rel (%p248) target = $region48
      $region47: #{tpu_custom_call.1} parent=5 // pred_region
        %s252 = ssub.s32 %s14, 1
        // Predicated region
        $region49: #{tpu_custom_call.1} parent=47 // pred_check
          %p253 = pneg %p103
        $region50: #{tpu_custom_call.1} parent=47 // pred_check_branch
          %255 = sbr.rel (%p253) target = $region52
        $region51: #{tpu_custom_call.1} parent=47 // pred_region
          %256 = dma.done [#allocation3], 4096
        $region52: #{tpu_custom_call.1} parent=47 // pred_fallthru
          _
        %p257 = scmp.lt.s32.totalorder %s19, 1
        %s258 = scalar_select %p257, %s19, 1
        %s259 = smul.addr %s258, 8
        %s260 = scalar_lea.vmem %s0, %s259
        %p261 = pneg %p40
        %p262 = pneg %p37
        %p263 = pneg %p61
        %p264 = pneg %p58
        %p265 = pneg %p82
        %p266 = pneg %p79
        %p267 = pneg %p103
        %p268 = pneg %p100
        %p269 = pneg %p124
        %p270 = pneg %p121
        %p271 = pneg %p145
        %p272 = pneg %p142
        %p273 = pneg %p166
        %p274 = pneg %p163
        %p275 = pneg %p192
        %p276 = pneg %p189
        %p277 = scmp.lt.s32.totalorder %s19, 1
        %s278 = scalar_select %p277, %s19, 1
        %s279 = smul.addr %s278, 8
        %s280 = scalar_lea.vmem %s7, %s279
        %p281 = scmp.lt.s32.totalorder %s19, 1
        %s282 = scalar_select %p281, %s19, 1
        %s283 = smul.addr %s282, 8
        %s284 = scalar_lea.vmem %s0, %s283
        %p285 = scmp.lt.s32.totalorder %s19, 1
        %s286 = scalar_select %p285, %s19, 1
        %s287 = smul.addr %s286, 8
        %s288 = scalar_lea.vmem %s7, %s287
        %v289 = vld [vmem:[%s284] sm:$0xff]
        %v290 = vld [vmem:[%s1] sm:$0xff]
        %v291 = vld [vmem:[%s2] sm:$0x1]
        %v293 = vlaneseq
        %v294 = vshrl.u32 %v293, 7
        %v295 = vsub.s32 0, %v294
        %v296 = vrot.slane %v291, %v295
        %vm298 = vcmask 64512
        %v300 = vsel %vm298, %v289, 0
        %302 = vmatprep.subr.mxu0 0.0
        %303 = vmatpush1.msra.mxu0 %v290
        %304 = vmatprep.subr.mxu0 0.0
        %305 = vmatpush1.msra.mxu0 0.0
        %306 = vmatprep.subr.mxu0 0.0
        %307 = vmatpush1.msra.mxu0 0.0
        %308 = vmatprep.subr.mxu0 0.0
        %309 = vmatpush1.msra.mxu0 0.0
        %310 = vmatprep.subr.mxu0 0.0
        %311 = vmatpush1.msra.mxu0 0.0
        %312 = vmatprep.subr.mxu0 0.0
        %313 = vmatpush1.msra.mxu0 0.0
        %314 = vmatprep.subr.mxu0 0.0
        %315 = vmatpush1.msra.mxu0 0.0
        %316 = vmatprep.subr.mxu0 0.0
        %317 = vmatpush1.msra.mxu0 0.0
        %318 = vmatprep.subr.mxu0 0.0
        %319 = vmatpush1.msra.mxu0 0.0
        %320 = vmatprep.subr.mxu0 0.0
        %321 = vmatpush1.msra.mxu0 0.0
        %322 = vmatprep.subr.mxu0 0.0
        %323 = vmatpush1.msra.mxu0 0.0
        %324 = vmatprep.subr.mxu0 0.0
        %325 = vmatpush1.msra.mxu0 0.0
        %326 = vmatprep.subr.mxu0 0.0
        %327 = vmatpush1.msra.mxu0 0.0
        %328 = vmatprep.subr.mxu0 0.0
        %329 = vmatpush1.msra.mxu0 0.0
        %330 = vmatprep.subr.mxu0 0.0
        %331 = vmatpush1.msra.mxu0 0.0
        %332 = vmatprep.subr.mxu0 0.0
        %333 = vmatpush1.msra.mxu0 0.0
        %334 = vmatprep.subr.mxu0 0.0
        %335 = vmatpush1.msra.mxu0 0.0
        %336 = vmatprep.subr.mxu0 0.0
        %337 = vmatpush1.msra.mxu0 0.0
        %338 = vmatprep.subr.mxu0 0.0
        %339 = vmatpush1.msra.mxu0 0.0
        %340 = vmatprep.subr.mxu0 0.0
        %341 = vmatpush1.msra.mxu0 0.0
        %342 = vmatprep.subr.mxu0 0.0
        %343 = vmatpush1.msra.mxu0 0.0
        %344 = vmatprep.subr.mxu0 0.0
        %345 = vmatpush1.msra.mxu0 0.0
        %346 = vmatprep.subr.mxu0 0.0
        %347 = vmatpush1.msra.mxu0 0.0
        %348 = vmatprep.subr.mxu0 0.0
        %349 = vmatpush1.msra.mxu0 0.0
        %350 = vmatprep.subr.mxu0 0.0
        %351 = vmatpush1.msra.mxu0 0.0
        %352 = vmatprep.subr.mxu0 0.0
        %353 = vmatpush1.msra.mxu0 0.0
        %354 = vmatprep.subr.mxu0 0.0
        %355 = vmatpush1.msra.mxu0 0.0
        %356 = vmatprep.subr.mxu0 0.0
        %357 = vmatpush1.msra.mxu0 0.0
        %358 = vmatprep.subr.mxu0 0.0
        %359 = vmatpush1.msra.mxu0 0.0
        %360 = vmatprep.subr.mxu0 0.0
        %361 = vmatpush1.msra.mxu0 0.0
        %362 = vmatprep.subr.mxu0 0.0
        %363 = vmatpush1.msra.mxu0 0.0
        %364 = vmatprep.subr.mxu0 0.0
        %365 = vmatpush1.msra.mxu0 0.0
        %366 = vmatprep.mubr.f32.mxu0 0.0
        %367 = vmatmul.mubr.f32.gmra.mrb[0].mxu0 %v300
        %v368 = vpop.f32.mrb[0].mxu0
        %v369 = vadd.f32 %v296, %v368
        %v370 = vpop.f32.mrb[0].mxu0
        %371 = vdwg.mxu0
        %v372 = vtanh.pop %v369
        %v373 = vld [vmem:[#allocation2] sm:$0xff]
        %v374 = vld [vmem:[#allocation2 + $0x8] sm:$0xff]
        %v375 = vld [vmem:[#allocation2 + $0x10] sm:$0xff]
        %v376 = vld [vmem:[#allocation2 + $0x18] sm:$0xff]
        %v377 = vld [vmem:[#allocation2 + $0x20] sm:$0xff]
        %v378 = vld [vmem:[#allocation2 + $0x28] sm:$0xff]
        %v379 = vld [vmem:[#allocation2 + $0x30] sm:$0xff]
        %v380 = vld [vmem:[#allocation2 + $0x38] sm:$0xff]
        %v381 = vld [vmem:[#allocation2 + $0x40] sm:$0xff]
        %v382 = vld [vmem:[#allocation2 + $0x48] sm:$0xff]
        %v383 = vld [vmem:[#allocation2 + $0x50] sm:$0xff]
        %v384 = vld [vmem:[#allocation2 + $0x58] sm:$0xff]
        %v385 = vld [vmem:[#allocation2 + $0x60] sm:$0xff]
        %v386 = vld [vmem:[#allocation2 + $0x68] sm:$0xff]
        %v387 = vld [vmem:[#allocation2 + $0x70] sm:$0xff]
        %v388 = vld [vmem:[#allocation2 + $0x78] sm:$0xff]
        %v389 = vld [vmem:[%s4] sm:$0x1]
        %v391 = vlaneseq
        %v392 = vshrl.u32 %v391, 7
        %v393 = vsub.s32 0, %v392
        %v394 = vrot.slane %v389, %v393
        %396 = vmatprep.subr.mxu0 0.0
        %397 = vmatpush1.msra.mxu0 %v373
        %398 = vmatprep.subr.mxu0 0.0
        %399 = vmatpush1.msra.mxu0 %v374
        %400 = vmatprep.subr.mxu0 0.0
        %401 = vmatpush1.msra.mxu0 %v375
        %402 = vmatprep.subr.mxu0 0.0
        %403 = vmatpush1.msra.mxu0 %v376
        %404 = vmatprep.subr.mxu0 0.0
        %405 = vmatpush1.msra.mxu0 %v377
        %406 = vmatprep.subr.mxu0 0.0
        %407 = vmatpush1.msra.mxu0 %v378
        %408 = vmatprep.subr.mxu0 0.0
        %409 = vmatpush1.msra.mxu0 %v379
        %410 = vmatprep.subr.mxu0 0.0
        %411 = vmatpush1.msra.mxu0 %v380
        %412 = vmatprep.subr.mxu0 0.0
        %413 = vmatpush1.msra.mxu0 %v381
        %414 = vmatprep.subr.mxu0 0.0
        %415 = vmatpush1.msra.mxu0 %v382
        %416 = vmatprep.subr.mxu0 0.0
        %417 = vmatpush1.msra.mxu0 %v383
        %418 = vmatprep.subr.mxu0 0.0
        %419 = vmatpush1.msra.mxu0 %v384
        %420 = vmatprep.subr.mxu0 0.0
        %421 = vmatpush1.msra.mxu0 %v385
        %422 = vmatprep.subr.mxu0 0.0
        %423 = vmatpush1.msra.mxu0 %v386
        %424 = vmatprep.subr.mxu0 0.0
        %425 = vmatpush1.msra.mxu0 %v387
        %426 = vmatprep.subr.mxu0 0.0
        %427 = vmatpush1.msra.mxu0 %v388
        %428 = vmatprep.subr.mxu0 0.0
        %429 = vmatpush1.msra.mxu0 0.0
        %430 = vmatprep.subr.mxu0 0.0
        %431 = vmatpush1.msra.mxu0 0.0
        %432 = vmatprep.subr.mxu0 0.0
        %433 = vmatpush1.msra.mxu0 0.0
        %434 = vmatprep.subr.mxu0 0.0
        %435 = vmatpush1.msra.mxu0 0.0
        %436 = vmatprep.subr.mxu0 0.0
        %437 = vmatpush1.msra.mxu0 0.0
        %438 = vmatprep.subr.mxu0 0.0
        %439 = vmatpush1.msra.mxu0 0.0
        %440 = vmatprep.subr.mxu0 0.0
        %441 = vmatpush1.msra.mxu0 0.0
        %442 = vmatprep.subr.mxu0 0.0
        %443 = vmatpush1.msra.mxu0 0.0
        %444 = vmatprep.subr.mxu0 0.0
        %445 = vmatpush1.msra.mxu0 0.0
        %446 = vmatprep.subr.mxu0 0.0
        %447 = vmatpush1.msra.mxu0 0.0
        %448 = vmatprep.subr.mxu0 0.0
        %449 = vmatpush1.msra.mxu0 0.0
        %450 = vmatprep.subr.mxu0 0.0
        %451 = vmatpush1.msra.mxu0 0.0
        %452 = vmatprep.subr.mxu0 0.0
        %453 = vmatpush1.msra.mxu0 0.0
        %454 = vmatprep.subr.mxu0 0.0
        %455 = vmatpush1.msra.mxu0 0.0
        %456 = vmatprep.subr.mxu0 0.0
        %457 = vmatpush1.msra.mxu0 0.0
        %458 = vmatprep.subr.mxu0 0.0
        %459 = vmatpush1.msra.mxu0 0.0
        %460 = vmatprep.mubr.f32.mxu0 0.0
        %461 = vmatmul.mubr.f32.gmra.mrb[0].mxu0 %v372
        %v462 = vpop.f32.mrb[0].mxu0
        %v463 = vadd.f32 %v394, %v462
        %v464 = vpop.f32.mrb[0].mxu0
        %465 = vdwg.mxu0
        %v466 = vtanh.pop %v463
        %s467 = scalar_lea.vmem [#allocation2], 128
        %v468 = vld [vmem:[%s467] sm:$0xff]
        %v469 = vld [vmem:[%s467 + $0x8] sm:$0xff]
        %v470 = vld [vmem:[%s467 + $0x10] sm:$0xff]
        %v471 = vld [vmem:[%s467 + $0x18] sm:$0xff]
        %v472 = vld [vmem:[%s467 + $0x20] sm:$0xff]
        %v473 = vld [vmem:[%s467 + $0x28] sm:$0xff]
        %v474 = vld [vmem:[%s467 + $0x30] sm:$0xff]
        %v475 = vld [vmem:[%s467 + $0x38] sm:$0xff]
        %v476 = vld [vmem:[%s467 + $0x40] sm:$0xff]
        %v477 = vld [vmem:[%s467 + $0x48] sm:$0xff]
        %v478 = vld [vmem:[%s467 + $0x50] sm:$0xff]
        %v479 = vld [vmem:[%s467 + $0x58] sm:$0xff]
        %v480 = vld [vmem:[%s467 + $0x60] sm:$0xff]
        %v481 = vld [vmem:[%s467 + $0x68] sm:$0xff]
        %v482 = vld [vmem:[%s467 + $0x70] sm:$0xff]
        %v483 = vld [vmem:[%s467 + $0x78] sm:$0xff]
        %s484 = scalar_lea.vmem %s4, 1
        %v485 = vld [vmem:[%s484] sm:$0x1]
        %v487 = vlaneseq
        %v488 = vshrl.u32 %v487, 7
        %v489 = vsub.s32 0, %v488
        %v490 = vrot.slane %v485, %v489
        %492 = vmatprep.subr.mxu0 0.0
        %493 = vmatpush1.msra.mxu0 %v468
        %494 = vmatprep.subr.mxu0 0.0
        %495 = vmatpush1.msra.mxu0 %v469
        %496 = vmatprep.subr.mxu0 0.0
        %497 = vmatpush1.msra.mxu0 %v470
        %498 = vmatprep.subr.mxu0 0.0
        %499 = vmatpush1.msra.mxu0 %v471
        %500 = vmatprep.subr.mxu0 0.0
        %501 = vmatpush1.msra.mxu0 %v472
        %502 = vmatprep.subr.mxu0 0.0
        %503 = vmatpush1.msra.mxu0 %v473
        %504 = vmatprep.subr.mxu0 0.0
        %505 = vmatpush1.msra.mxu0 %v474
        %506 = vmatprep.subr.mxu0 0.0
        %507 = vmatpush1.msra.mxu0 %v475
        %508 = vmatprep.subr.mxu0 0.0
        %509 = vmatpush1.msra.mxu0 %v476
        %510 = vmatprep.subr.mxu0 0.0
        %511 = vmatpush1.msra.mxu0 %v477
        %512 = vmatprep.subr.mxu0 0.0
        %513 = vmatpush1.msra.mxu0 %v478
        %514 = vmatprep.subr.mxu0 0.0
        %515 = vmatpush1.msra.mxu0 %v479
        %516 = vmatprep.subr.mxu0 0.0
        %517 = vmatpush1.msra.mxu0 %v480
        %518 = vmatprep.subr.mxu0 0.0
        %519 = vmatpush1.msra.mxu0 %v481
        %520 = vmatprep.subr.mxu0 0.0
        %521 = vmatpush1.msra.mxu0 %v482
        %522 = vmatprep.subr.mxu0 0.0
        %523 = vmatpush1.msra.mxu0 %v483
        %524 = vmatprep.subr.mxu0 0.0
        %525 = vmatpush1.msra.mxu0 0.0
        %526 = vmatprep.subr.mxu0 0.0
        %527 = vmatpush1.msra.mxu0 0.0
        %528 = vmatprep.subr.mxu0 0.0
        %529 = vmatpush1.msra.mxu0 0.0
        %530 = vmatprep.subr.mxu0 0.0
        %531 = vmatpush1.msra.mxu0 0.0
        %532 = vmatprep.subr.mxu0 0.0
        %533 = vmatpush1.msra.mxu0 0.0
        %534 = vmatprep.subr.mxu0 0.0
        %535 = vmatpush1.msra.mxu0 0.0
        %536 = vmatprep.subr.mxu0 0.0
        %537 = vmatpush1.msra.mxu0 0.0
        %538 = vmatprep.subr.mxu0 0.0
        %539 = vmatpush1.msra.mxu0 0.0
        %540 = vmatprep.subr.mxu0 0.0
        %541 = vmatpush1.msra.mxu0 0.0
        %542 = vmatprep.subr.mxu0 0.0
        %543 = vmatpush1.msra.mxu0 0.0
        %544 = vmatprep.subr.mxu0 0.0
        %545 = vmatpush1.msra.mxu0 0.0
        %546 = vmatprep.subr.mxu0 0.0
        %547 = vmatpush1.msra.mxu0 0.0
        %548 = vmatprep.subr.mxu0 0.0
        %549 = vmatpush1.msra.mxu0 0.0
        %550 = vmatprep.subr.mxu0 0.0
        %551 = vmatpush1.msra.mxu0 0.0
        %552 = vmatprep.subr.mxu0 0.0
        %553 = vmatpush1.msra.mxu0 0.0
        %554 = vmatprep.subr.mxu0 0.0
        %555 = vmatpush1.msra.mxu0 0.0
        %556 = vmatprep.mubr.f32.mxu0 0.0
        %557 = vmatmul.mubr.f32.gmra.mrb[0].mxu0 %v466
        %v558 = vpop.f32.mrb[0].mxu0
        %v559 = vadd.f32 %v490, %v558
        %v560 = vpop.f32.mrb[0].mxu0
        %561 = vdwg.mxu0
        %v562 = vtanh.pop %v559
        %v563 = vld [vmem:[%s5] sm:$0xff]
        %v564 = vld [vmem:[%s5 + $0x8] sm:$0xff]
        %v565 = vld [vmem:[%s5 + $0x10] sm:$0xff]
        %v566 = vld [vmem:[%s5 + $0x18] sm:$0xff]
        %v567 = vld [vmem:[%s5 + $0x20] sm:$0xff]
        %v568 = vld [vmem:[%s5 + $0x28] sm:$0xff]
        %v569 = vld [vmem:[%s5 + $0x30] sm:$0xff]
        %v570 = vld [vmem:[%s5 + $0x38] sm:$0xff]
        %v571 = vld [vmem:[%s5 + $0x40] sm:$0xff]
        %v572 = vld [vmem:[%s5 + $0x48] sm:$0xff]
        %v573 = vld [vmem:[%s5 + $0x50] sm:$0xff]
        %v574 = vld [vmem:[%s5 + $0x58] sm:$0xff]
        %v575 = vld [vmem:[%s5 + $0x60] sm:$0xff]
        %v576 = vld [vmem:[%s5 + $0x68] sm:$0xff]
        %v577 = vld [vmem:[%s5 + $0x70] sm:$0xff]
        %v578 = vld [vmem:[%s5 + $0x78] sm:$0xff]
        %v579 = vld [vmem:[%s6] sm:$0x1]
        %v581 = vlaneseq
        %v582 = vshrl.u32 %v581, 7
        %v583 = vsub.s32 0, %v582
        %v584 = vrot.slane %v579, %v583
        %586 = vmatprep.subr.mxu0 0.0
        %587 = vmatpush1.msra.mxu0 %v563
        %588 = vmatprep.subr.mxu0 0.0
        %589 = vmatpush1.msra.mxu0 %v564
        %590 = vmatprep.subr.mxu0 0.0
        %591 = vmatpush1.msra.mxu0 %v565
        %592 = vmatprep.subr.mxu0 0.0
        %593 = vmatpush1.msra.mxu0 %v566
        %594 = vmatprep.subr.mxu0 0.0
        %595 = vmatpush1.msra.mxu0 %v567
        %596 = vmatprep.subr.mxu0 0.0
        %597 = vmatpush1.msra.mxu0 %v568
        %598 = vmatprep.subr.mxu0 0.0
        %599 = vmatpush1.msra.mxu0 %v569
        %600 = vmatprep.subr.mxu0 0.0
        %601 = vmatpush1.msra.mxu0 %v570
        %602 = vmatprep.subr.mxu0 0.0
        %603 = vmatpush1.msra.mxu0 %v571
        %604 = vmatprep.subr.mxu0 0.0
        %605 = vmatpush1.msra.mxu0 %v572
        %606 = vmatprep.subr.mxu0 0.0
        %607 = vmatpush1.msra.mxu0 %v573
        %608 = vmatprep.subr.mxu0 0.0
        %609 = vmatpush1.msra.mxu0 %v574
        %610 = vmatprep.subr.mxu0 0.0
        %611 = vmatpush1.msra.mxu0 %v575
        %612 = vmatprep.subr.mxu0 0.0
        %613 = vmatpush1.msra.mxu0 %v576
        %614 = vmatprep.subr.mxu0 0.0
        %615 = vmatpush1.msra.mxu0 %v577
        %616 = vmatprep.subr.mxu0 0.0
        %617 = vmatpush1.msra.mxu0 %v578
        %618 = vmatprep.subr.mxu0 0.0
        %619 = vmatpush1.msra.mxu0 0.0
        %620 = vmatprep.subr.mxu0 0.0
        %621 = vmatpush1.msra.mxu0 0.0
        %622 = vmatprep.subr.mxu0 0.0
        %623 = vmatpush1.msra.mxu0 0.0
        %624 = vmatprep.subr.mxu0 0.0
        %625 = vmatpush1.msra.mxu0 0.0
        %626 = vmatprep.subr.mxu0 0.0
        %627 = vmatpush1.msra.mxu0 0.0
        %628 = vmatprep.subr.mxu0 0.0
        %629 = vmatpush1.msra.mxu0 0.0
        %630 = vmatprep.subr.mxu0 0.0
        %631 = vmatpush1.msra.mxu0 0.0
        %632 = vmatprep.subr.mxu0 0.0
        %633 = vmatpush1.msra.mxu0 0.0
        %634 = vmatprep.subr.mxu0 0.0
        %635 = vmatpush1.msra.mxu0 0.0
        %636 = vmatprep.subr.mxu0 0.0
        %637 = vmatpush1.msra.mxu0 0.0
        %638 = vmatprep.subr.mxu0 0.0
        %639 = vmatpush1.msra.mxu0 0.0
        %640 = vmatprep.subr.mxu0 0.0
        %641 = vmatpush1.msra.mxu0 0.0
        %642 = vmatprep.subr.mxu0 0.0
        %643 = vmatpush1.msra.mxu0 0.0
        %644 = vmatprep.subr.mxu0 0.0
        %645 = vmatpush1.msra.mxu0 0.0
        %646 = vmatprep.subr.mxu0 0.0
        %647 = vmatpush1.msra.mxu0 0.0
        %648 = vmatprep.subr.mxu0 0.0
        %649 = vmatpush1.msra.mxu0 0.0
        %650 = vmatprep.mubr.f32.mxu0 0.0
        %651 = vmatmul.mubr.f32.gmra.mrb[0].mxu0 %v562
        %v652 = vpop.f32.mrb[0].mxu0
        %v653 = vadd.f32 %v584, %v652
        %v654 = vpop.f32.mrb[0].mxu0
        %655 = vdwg.mxu0
        %vm656 = vcmask 31744
        %657 = vst.msk [vmem:[%s288] sm:$0xff] %vm656, %v653
        %p658 = scmp.lt.s32.totalorder %s19, 1
        %s659 = scalar_select %p658, %s19, 1
        %s660 = smul.addr %s659, 8
        %s661 = scalar_lea.vmem %s7, %s660
        // Predicated region
        $region53: #{tpu_custom_call.1} parent=47 // pred_check
          %p662 = pneg %p189
        $region54: #{tpu_custom_call.1} parent=47 // pred_check_branch
          %664 = sbr.rel (%p662) target = $region56
        $region55: #{tpu_custom_call.1} parent=47 // pred_region
          _
        $region56: #{tpu_custom_call.1} parent=47 // pred_fallthru
          _
      $region48: #{tpu_custom_call.1} parent=5 // pred_fallthru
        _
      %p665 = scmp.le.s32.totalorder 2, %s14
      // Predicated region
      $region57: #{tpu_custom_call.1} parent=5 // pred_check
        %p666 = pneg %p665
      $region58: #{tpu_custom_call.1} parent=5 // pred_check_branch
        %668 = sbr.rel (%p666) target = $region60
      $region59: #{tpu_custom_call.1} parent=5 // pred_region
        %s669 = ssub.s32 %s14, 2
        // Predicated region
        $region61: #{tpu_custom_call.1} parent=59 // pred_check
          %p670 = pneg %p195
        $region62: #{tpu_custom_call.1} parent=59 // pred_check_branch
          %672 = sbr.rel (%p670) target = $region64
        $region63: #{tpu_custom_call.1} parent=59 // pred_region
          %p673 = scmp.lt.s32.totalorder %s20, 1
          %s674 = scalar_select %p673, %s20, 1
          %s675 = smul.addr %s674, 8
          %s676 = scalar_lea.vmem %s7, %s675
        $region64: #{tpu_custom_call.1} parent=59 // pred_fallthru
          _
      $region60: #{tpu_custom_call.1} parent=5 // pred_fallthru
        _
    $region6: #{tpu_custom_call.1} parent=1 // loop_footer
      %s18 = sadd.s32 1, %s14
    $region7: #{tpu_custom_call.1} parent=1 // loop_footer_branch
      %13 = sbr.rel target = $region3
    $region8: #{tpu_custom_call.1} parent=1 // loop_exit
      _
    %677 = vsyncpa [#allocation3], 1
    %s678 = scalar_lea.sflag [#allocation3], 1
    %679 = vsyncpa %s678, 1

</llo_original>
